<compile_context>
chip_gen: v7x
topology: tpu7x:2x2x1
jax: 0.10.0
libtpu: 0.0.40
codegen_flags: <defaults>
</compile_context>

<pallas_src>
import functools

import jax
import jax.numpy as jnp
from jax.experimental import pallas as pl
from jax.experimental.pallas import tpu as pltpu

_INV_SQRT2 = 0.7071067811865476


def _round_up(x: int, m: int) -> int:
    return ((x + m - 1) // m) * m


def _gelu_f32(x):
    # Exact (erf-based) GELU, matching torch.nn.GELU() default, in f32.
    xf = x.astype(jnp.float32)
    return 0.5 * xf * (1.0 + jax.lax.erf(xf * _INV_SQRT2))


def _ff_kernel(x_ref, w_ref, b_ref, o_ref, acc_ref, h_ref):
    # General kernel: grid (i, j, k) = (M tiles, N tiles, K tiles), K last.
    #   x_ref : (tm, tk) activation tile
    #   w_ref : (tk, tn) weight tile ([dim, dim_out] layout)
    #   b_ref : (1, tn)  bias tile
    #   o_ref : (tm, tn) output tile
    #   acc_ref: (tm, tn) f32 accumulator (persists across the K axis)
    #   h_ref : (nk, tm, tk) cached gelu(x) for the current M-row tile
    j = pl.program_id(1)
    k = pl.program_id(2)

    @pl.when(k == 0)
    def _():
        acc_ref[...] = jnp.zeros_like(acc_ref)

    # GELU hoisted out of the N loop: compute once per (i, k) tile at j == 0,
    # cache in VMEM in the MXU input dtype, reuse for every j > 0.
    # Dropout(p=0.0) is a no-op.
    @pl.when(j == 0)
    def _():
        h_ref[k] = _gelu_f32(x_ref[...]).astype(h_ref.dtype)

    acc_ref[...] += jnp.dot(
        h_ref[k], w_ref[...], preferred_element_type=jnp.float32
    )

    @pl.when(k == pl.num_programs(2) - 1)
    def _():
        o_ref[...] = (acc_ref[...] + b_ref[...].astype(jnp.float32)).astype(o_ref.dtype)


def _ff_kernel_single_k(x_ref, w_ref, b_ref, o_ref, h_ref):
    # Fast path for a single K step (Kp == tk): no accumulator, no pl.when
    # init/finalize around the reduction. GELU still cached across the N axis.
    j = pl.program_id(1)

    @pl.when(j == 0)
    def _():
        h_ref[...] = _gelu_f32(x_ref[...]).astype(h_ref.dtype)

    o_ref[...] = (
        jnp.dot(h_ref[...], w_ref[...], preferred_element_type=jnp.float32)
        + b_ref[...].astype(jnp.float32)
    ).astype(o_ref.dtype)


def _pick_lane_tile(d: int, cap: int) -> int:
    """Lane-dim tile: multiple of 128, <= cap, minimizing padding of d
    (tie-break toward the largest tile)."""
    d_aligned = _round_up(d, 128)
    if d_aligned <= cap:
        return d_aligned
    best_t, best_pad = 128, _round_up(d, 128)
    for t in range(128, cap + 1, 128):
        pad = _round_up(d, t)
        if pad < best_pad or (pad == best_pad and t > best_t):
            best_t, best_pad = t, pad
    return best_t


def _vmem_capacity_bytes() -> int:
    try:
        info = pltpu.get_tpu_info()
        cap = getattr(info, "vmem_capacity_bytes", None)
        if cap:
            return int(cap)
    except Exception:
        pass
    return 64 * 1024 * 1024  # conservative fallback (v7x per-TC size)


def _is_v7x() -> bool:
    try:
        return "v7" in jax.devices()[0].device_kind.lower()
    except Exception:
        return False


@functools.partial(jax.jit, static_argnames=("tm_max", "tn_max", "tk_max"))
def feed_forward(x, w, b, *, tm_max=512, tn_max=512, tk_max=1024):
    """x: [B, S, dim], w: [dim, dim_out] (pre-transposed vs torch), b: [dim_out]."""
    # TODO(synk): only dropout p = 0.0 (the module's default) is implemented;
    # training-mode dropout with p > 0 is not.
    B, S, dim = x.shape
    dim_out = w.shape[1]
    M = B * S

    x_isz = x.dtype.itemsize
    w_isz = w.dtype.itemsize
    b_isz = b.dtype.itemsize

    # Generation-aware VMEM budget: ~75% of physical per-TC VMEM
    # (~96 MiB on v5e/v6e, ~48 MiB on v7x's 64 MiB).
    budget = int(0.75 * _vmem_capacity_bytes())

    # Lane dims (tk, tn): 128-multiples chosen to minimize K/N padding.
    tk = _pick_lane_tile(dim, tk_max)
    tn = _pick_lane_tile(dim_out, tn_max)
    Kp = _round_up(dim, tk)
    Np = _round_up(dim_out, tn)

    # Row tile: as large as allowed; shrink only if the double-buffered working
    # set (incl. GELU cache and f32 accumulator) exceeds the VMEM budget.
    tm = min(tm_max, _round_up(M, 8))

    def _footprint(tm_):
        return (
            2 * tm_ * tk * x_isz      # x tiles (double-buffered)
            + 2 * tk * tn * w_isz     # weight tiles (double-buffered)
            + 2 * tm_ * tn * x_isz    # output tiles (double-buffered)
            + 2 * tn * b_isz          # bias tiles
            + tm_ * tn * 4            # f32 accumulator
            + tm_ * Kp * w_isz        # cached gelu(x) for one M-row tile
        )

    while tm > 64 and _footprint(tm) > budget:
        tm = _round_up(tm // 2, 8)
    Mp = _round_up(M, tm)

    nm, nn, nk = Mp // tm, Np // tn, Kp // tk

    # Zero-padding is exact: gelu(0) = 0, padded weight rows/cols are zero, and
    # padded output rows/cols are sliced off below. Guarded so aligned dims pad
    # nothing. (Production: pre-pad static weight/bias once outside the call.)
    x2 = x.reshape(M, dim)
    if (Mp, Kp) != (M, dim):
        x2 = jnp.pad(x2, ((0, Mp - M), (0, Kp - dim)))
    w2 = w
    if (Kp, Np) != (dim, dim_out):
        w2 = jnp.pad(w, ((0, Kp - dim), (0, Np - dim_out)))
    b2 = b.reshape(1, dim_out)
    if Np != dim_out:
        b2 = jnp.pad(b2, ((0, 0), (0, Np - dim_out)))

    vmem_limit = int(min(budget, max(32 * 1024 * 1024, int(_footprint(tm) * 1.25))))

    cost = pl.CostEstimate(
        flops=2 * Mp * Kp * Np,
        transcendentals=Mp * Kp,  # erf once per input element (GELU is cached)
        bytes_accessed=(
            Mp * Kp * x_isz + Kp * Np * w_isz + Np * b_isz + Mp * Np * x_isz
        ),
    )

    # The j (N) axis carries the GELU-cache dependency and the k axis is the
    # reduction -> both "arbitrary". The M axis is independent; on v7x shard it
    # across the two TensorCores when there is more than one M tile.
    m_sem = "parallel"
    if _is_v7x() and nm > 1:
        m_sem = pltpu.CORE_PARALLEL

    if nk == 1:
        out2 = pl.pallas_call(
            _ff_kernel_single_k,
            out_shape=jax.ShapeDtypeStruct((Mp, Np), x.dtype),
            grid_spec=pltpu.PrefetchScalarGridSpec(
                num_scalar_prefetch=0,
                grid=(nm, nn),
                in_specs=[
                    pl.BlockSpec((tm, tk), lambda i, j: (i, 0)),  # activations
                    pl.BlockSpec((tk, tn), lambda i, j: (0, j)),  # weight
                    pl.BlockSpec((1, tn), lambda i, j: (0, j)),   # bias
                ],
                out_specs=pl.BlockSpec((tm, tn), lambda i, j: (i, j)),
                scratch_shapes=[pltpu.VMEM((tm, tk), w.dtype)],    # gelu cache
            ),
            compiler_params=pltpu.CompilerParams(
                dimension_semantics=(m_sem, "arbitrary"),
                vmem_limit_bytes=vmem_limit,
            ),
            cost_estimate=cost,
        )(x2, w2, b2)
    else:
        out2 = pl.pallas_call(
            _ff_kernel,
            out_shape=jax.ShapeDtypeStruct((Mp, Np), x.dtype),
            grid_spec=pltpu.PrefetchScalarGridSpec(
                num_scalar_prefetch=0,
                grid=(nm, nn, nk),
                in_specs=[
                    pl.BlockSpec((tm, tk), lambda i, j, k: (i, k)),  # activations
                    pl.BlockSpec((tk, tn), lambda i, j, k: (k, j)),  # weight
                    pl.BlockSpec((1, tn), lambda i, j, k: (0, j)),   # bias
                ],
                out_specs=pl.BlockSpec((tm, tn), lambda i, j, k: (i, j)),
                scratch_shapes=[
                    pltpu.VMEM((tm, tn), jnp.float32),   # f32 accumulator
                    pltpu.VMEM((nk, tm, tk), w.dtype),   # gelu cache (row tile)
                ],
            ),
            compiler_params=pltpu.CompilerParams(
                dimension_semantics=(m_sem, "arbitrary", "arbitrary"),
                vmem_limit_bytes=vmem_limit,
            ),
            cost_estimate=cost,
        )(x2, w2, b2)

    if (Mp, Np) != (M, dim_out):
        out2 = out2[:M, :dim_out]
    return out2.reshape(B, S, dim_out)


def _reference(x, w, b):
    h = 0.5 * x * (1.0 + jax.lax.erf(x / jnp.sqrt(2.0)))
    return h @ w + b


if __name__ == "__main__":
    # Module config: dim=32, dim_out defaults to dim, dropout=0.0
    B, S, dim = 2, 8, 32
    dim_out = dim

    key = jax.random.PRNGKey(0)
    kx, kw, kb = jax.random.split(key, 3)

    x = jax.random.normal(kx, (B, S, dim), dtype=jnp.float32)
    # PyTorch stores Linear weight as [dim_out, dim]; keep it pre-transposed
    # as [dim, dim_out] for the kernel.
    bound = 1.0 / jnp.sqrt(dim)
    w = jax.random.uniform(kw, (dim, dim_out), jnp.float32, -bound, bound)
    b = jax.random.uniform(kb, (dim_out,), jnp.float32, -bound, bound)

    out = feed_forward(x, w, b)
    out = jax.block_until_ready(out)

    ref = _reference(x, w, b)
    assert out.shape == (B, S, dim_out)
    assert jnp.allclose(out, ref, atol=1e-5, rtol=1e-5), "mismatch vs reference"

    print("KERNEL_OK")
</pallas_src>

<mosaic_0001>
module attributes {stable_mosaic.version = 11 : i64} {
  func.func @_ff_kernel_single_k(%arg0: i32, %arg1: i32, %arg2: memref<16x128xf32, #tpu.memory_space<vmem>>, %arg3: memref<128x128xf32, #tpu.memory_space<vmem>>, %arg4: memref<1x128xf32, #tpu.memory_space<vmem>>, %arg5: memref<16x128xf32, #tpu.memory_space<vmem>>, %arg6: memref<16x128xf32, #tpu.memory_space<vmem>>) attributes {dimension_semantics = [#tpu.dimension_semantics<parallel>, #tpu.dimension_semantics<arbitrary>], iteration_bounds = array<i64: 1, 1>, scalar_prefetch = 0 : i64, scratch_operands = 1 : i64, tpu.core_type = #tpu.core_type<tc>, window_params = [{transform_indices = @transform_0, window_bounds = array<i64: 16, 128>}, {transform_indices = @transform_1, window_bounds = array<i64: 128, 128>}, {transform_indices = @transform_2, window_bounds = array<i64: 1, 128>}, {transform_indices = @transform_3, window_bounds = array<i64: 16, 128>}]} {
    %c0_i32 = arith.constant 0 : i32
    %0 = arith.cmpi eq, %arg1, %c0_i32 : i32
    %1 = arith.extui %0 : i1 to i32
    %c0_i32_0 = arith.constant 0 : i32
    %2 = arith.cmpi ne, %1, %c0_i32_0 : i32
    scf.if %2 {
      %c0_8 = arith.constant 0 : index
      %c0_9 = arith.constant 0 : index
      %10 = vector.load %arg2[%c0_8, %c0_9] : memref<16x128xf32, #tpu.memory_space<vmem>>, vector<16x128xf32>
      %cst_10 = arith.constant 5.000000e-01 : f32
      %11 = vector.broadcast %cst_10 : f32 to vector<16x128xf32>
      %12 = arith.mulf %11, %10 : vector<16x128xf32>
      %cst_11 = arith.constant 0.707106769 : f32
      %13 = vector.broadcast %cst_11 : f32 to vector<16x128xf32>
      %14 = arith.mulf %10, %13 : vector<16x128xf32>
      %15 = math.erf %14 : vector<16x128xf32>
      %cst_12 = arith.constant 1.000000e+00 : f32
      %16 = vector.broadcast %cst_12 : f32 to vector<16x128xf32>
      %17 = arith.addf %16, %15 : vector<16x128xf32>
      %18 = arith.mulf %12, %17 : vector<16x128xf32>
      %c0_13 = arith.constant 0 : index
      %c0_14 = arith.constant 0 : index
      %19 = vector.load %arg6[%c0_13, %c0_14] : memref<16x128xf32, #tpu.memory_space<vmem>>, vector<16x128xf32>
      tpu.vector_store %arg6[%c0_13, %c0_14], %18 {strides = array<i32>} : memref<16x128xf32, #tpu.memory_space<vmem>>, vector<16x128xf32>,
    } else {
    }
    %c0 = arith.constant 0 : index
    %c0_1 = arith.constant 0 : index
    %3 = vector.load %arg6[%c0, %c0_1] : memref<16x128xf32, #tpu.memory_space<vmem>>, vector<16x128xf32>
    %c0_2 = arith.constant 0 : index
    %c0_3 = arith.constant 0 : index
    %4 = vector.load %arg3[%c0_2, %c0_3] : memref<128x128xf32, #tpu.memory_space<vmem>>, vector<128x128xf32>
    %cst = arith.constant dense<0.000000e+00> : vector<16x128xf32>
    %5 = tpu.matmul %3, %4, %cst {dimension_numbers = #tpu.dot_dimension_numbers<[1], [0], [0], [1], [0, 0, 1, 1], [], []>} : vector<16x128xf32>, vector<128x128xf32>, vector<16x128xf32> -> vector<16x128xf32>
    %c0_4 = arith.constant 0 : index
    %c0_5 = arith.constant 0 : index
    %6 = vector.load %arg4[%c0_4, %c0_5] : memref<1x128xf32, #tpu.memory_space<vmem>>, vector<1x128xf32>
    %7 = vector.broadcast %6 : vector<1x128xf32> to vector<16x128xf32>
    %8 = arith.addf %5, %7 : vector<16x128xf32>
    %c0_6 = arith.constant 0 : index
    %c0_7 = arith.constant 0 : index
    %9 = vector.load %arg5[%c0_6, %c0_7] : memref<16x128xf32, #tpu.memory_space<vmem>>, vector<16x128xf32>
    tpu.vector_store %arg5[%c0_6, %c0_7], %8 {strides = array<i32>} : memref<16x128xf32, #tpu.memory_space<vmem>>, vector<16x128xf32>,
    return
  }
  func.func @transform_0(%arg0: i32, %arg1: i32) -> (i32, i32) {
    %c0_i32 = arith.constant 0 : i32
    %c0_i32_0 = arith.constant 0 : i32
    return %arg0, %c0_i32 : i32, i32
  }
  func.func @transform_1(%arg0: i32, %arg1: i32) -> (i32, i32) {
    %c0_i32 = arith.constant 0 : i32
    %c0_i32_0 = arith.constant 0 : i32
    return %c0_i32, %arg1 : i32, i32
  }
  func.func @transform_2(%arg0: i32, %arg1: i32) -> (i32, i32) {
    %c0_i32 = arith.constant 0 : i32
    %c0_i32_0 = arith.constant 0 : i32
    return %c0_i32, %arg1 : i32, i32
  }
  func.func @transform_3(%arg0: i32, %arg1: i32) -> (i32, i32) {
    %c0_i32 = arith.constant 0 : i32
    return %arg0, %arg1 : i32, i32
  }
}

</mosaic_0001>

<llo_original>
// kernel: feed_forward.1
$region0: #{feed_forward.1}
  #allocation0 [shape = 'u32[]', space=smem, size = 0x4, offset = 0x4, fixed_abs, tag = 'smem constant byte address 0x4 - core index']
  #allocation1 [shape = 'u32[144,128]{1,0:T(1,128)}', space=vmem, size = 0x12000, scoped, tag = 'internal scratch']
  #allocation2 [shape = 'f32[16,128]{1,0:T(8,128)}', space=vmem, size = 0x2000, scoped, tag = 'scratch operand']
  %s0 = inlined_call_operand.vmem [shape: f32[16,128], index: 0, kind: input, shape index: {}]
  %s1 = inlined_call_operand.vmem [shape: f32[128,128], index: 1, kind: input, shape index: {}]
  %s2 = inlined_call_operand.vmem [shape: f32[1,128], index: 2, kind: input, shape index: {}]
  %s3 = inlined_call_operand.vmem [shape: f32[16,128], index: 3, kind: output, shape index: {}]
  %s4 = sld [smem:[#allocation0]]
  $region26: #{feed_forward.1} parent=0
    _
  %s6 = ssub.s32 1, %s4
  %s7 = scalar_select 0, %s6, %s4
  // Predicated region
  $region2: #{feed_forward.1} parent=0 // pred_check
    _
  $region3: #{feed_forward.1} parent=0 // pred_check_branch
    %9 = sbr.rel (0) target = $region5
  $region4: #{feed_forward.1} parent=0 // pred_region
    _
  $region5: #{feed_forward.1} parent=0 // pred_fallthru
    _
  // Predicated region
  $region6: #{feed_forward.1} parent=0 // pred_check
    _
  $region7: #{feed_forward.1} parent=0 // pred_check_branch
    %11 = sbr.rel (0) target = $region9
  $region8: #{feed_forward.1} parent=0 // pred_region
    _
  $region9: #{feed_forward.1} parent=0 // pred_fallthru
    _
  // Predicated region
  $region10: #{feed_forward.1} parent=0 // pred_check
    _
  $region11: #{feed_forward.1} parent=0 // pred_check_branch
    %13 = sbr.rel (0) target = $region13
  $region12: #{feed_forward.1} parent=0 // pred_region
    _
  $region13: #{feed_forward.1} parent=0 // pred_fallthru
    _
  %p14 = scmp.eq.s32.totalorder 0, 0
  // Predicated region
  $region14: #{feed_forward.1} parent=0 // pred_check
    %p15 = pneg %p14
  $region15: #{feed_forward.1} parent=0 // pred_check_branch
    %17 = sbr.rel (%p15) target = $region17
  $region16: #{feed_forward.1} parent=0 // pred_region
    %v18 = vld [vmem:[%s0] sm:$0xff]
    %v19 = vld [vmem:[%s0 + $0x8] sm:$0xff]
    %v20 = vmul.f32 %v18, 0.5
    %v21 = vmul.f32 %v19, 0.5
    %v22 = vmul.f32 %v18, 0.70710677
    %v23 = vmul.f32 %v19, 0.70710677
    %v24 = verf.f32.pop %v22
    %v25 = verf.f32.pop %v23
    %v26 = vadd.f32 %v24, 1.0
    %v27 = vadd.f32 %v25, 1.0
    %v28 = vmul.f32 %v20, %v26
    %v29 = vmul.f32 %v21, %v27
    %30 = vst [vmem:[#allocation2] sm:$0xff] %v28
    %31 = vst [vmem:[#allocation2 + $0x8] sm:$0xff] %v29
  $region17: #{feed_forward.1} parent=0 // pred_fallthru
    _
  %v32 = vld [vmem:[#allocation2] sm:$0xff]
  %v33 = vld [vmem:[#allocation2 + $0x8] sm:$0xff]
  %v34 = vld [vmem:[%s1] sm:$0xff]
  %v35 = vld [vmem:[%s1 + $0x8] sm:$0xff]
  %v36 = vld [vmem:[%s1 + $0x10] sm:$0xff]
  %v37 = vld [vmem:[%s1 + $0x18] sm:$0xff]
  %v38 = vld [vmem:[%s1 + $0x20] sm:$0xff]
  %v39 = vld [vmem:[%s1 + $0x28] sm:$0xff]
  %v40 = vld [vmem:[%s1 + $0x30] sm:$0xff]
  %v41 = vld [vmem:[%s1 + $0x38] sm:$0xff]
  %v42 = vld [vmem:[%s1 + $0x40] sm:$0xff]
  %v43 = vld [vmem:[%s1 + $0x48] sm:$0xff]
  %v44 = vld [vmem:[%s1 + $0x50] sm:$0xff]
  %v45 = vld [vmem:[%s1 + $0x58] sm:$0xff]
  %v46 = vld [vmem:[%s1 + $0x60] sm:$0xff]
  %v47 = vld [vmem:[%s1 + $0x68] sm:$0xff]
  %v48 = vld [vmem:[%s1 + $0x70] sm:$0xff]
  %v49 = vld [vmem:[%s1 + $0x78] sm:$0xff]
  %v50 = vld [vmem:[%s2] sm:$0x1]
  %v52 = vlaneseq
  %v53 = vshrl.u32 %v52, 7
  %v54 = vsub.s32 0, %v53
  %v55 = vrot.slane %v50, %v54
  %57 = vmatprep.subr.mxu0 0.0
  %58 = vmatpush1.msra.mxu0 %v34
  %59 = vmatprep.subr.mxu0 0.0
  %60 = vmatpush1.msra.mxu0 %v35
  %61 = vmatprep.subr.mxu0 0.0
  %62 = vmatpush1.msra.mxu0 %v36
  %63 = vmatprep.subr.mxu0 0.0
  %64 = vmatpush1.msra.mxu0 %v37
  %65 = vmatprep.subr.mxu0 0.0
  %66 = vmatpush1.msra.mxu0 %v38
  %67 = vmatprep.subr.mxu0 0.0
  %68 = vmatpush1.msra.mxu0 %v39
  %69 = vmatprep.subr.mxu0 0.0
  %70 = vmatpush1.msra.mxu0 %v40
  %71 = vmatprep.subr.mxu0 0.0
  %72 = vmatpush1.msra.mxu0 %v41
  %73 = vmatprep.subr.mxu0 0.0
  %74 = vmatpush1.msra.mxu0 %v42
  %75 = vmatprep.subr.mxu0 0.0
  %76 = vmatpush1.msra.mxu0 %v43
  %77 = vmatprep.subr.mxu0 0.0
  %78 = vmatpush1.msra.mxu0 %v44
  %79 = vmatprep.subr.mxu0 0.0
  %80 = vmatpush1.msra.mxu0 %v45
  %81 = vmatprep.subr.mxu0 0.0
  %82 = vmatpush1.msra.mxu0 %v46
  %83 = vmatprep.subr.mxu0 0.0
  %84 = vmatpush1.msra.mxu0 %v47
  %85 = vmatprep.subr.mxu0 0.0
  %86 = vmatpush1.msra.mxu0 %v48
  %87 = vmatprep.subr.mxu0 0.0
  %88 = vmatpush1.msra.mxu0 %v49
  %89 = vmatprep.subr.mxu0 0.0
  %90 = vmatpush1.msra.mxu0 0.0
  %91 = vmatprep.subr.mxu0 0.0
  %92 = vmatpush1.msra.mxu0 0.0
  %93 = vmatprep.subr.mxu0 0.0
  %94 = vmatpush1.msra.mxu0 0.0
  %95 = vmatprep.subr.mxu0 0.0
  %96 = vmatpush1.msra.mxu0 0.0
  %97 = vmatprep.subr.mxu0 0.0
  %98 = vmatpush1.msra.mxu0 0.0
  %99 = vmatprep.subr.mxu0 0.0
  %100 = vmatpush1.msra.mxu0 0.0
  %101 = vmatprep.subr.mxu0 0.0
  %102 = vmatpush1.msra.mxu0 0.0
  %103 = vmatprep.subr.mxu0 0.0
  %104 = vmatpush1.msra.mxu0 0.0
  %105 = vmatprep.subr.mxu0 0.0
  %106 = vmatpush1.msra.mxu0 0.0
  %107 = vmatprep.subr.mxu0 0.0
  %108 = vmatpush1.msra.mxu0 0.0
  %109 = vmatprep.subr.mxu0 0.0
  %110 = vmatpush1.msra.mxu0 0.0
  %111 = vmatprep.subr.mxu0 0.0
  %112 = vmatpush1.msra.mxu0 0.0
  %113 = vmatprep.subr.mxu0 0.0
  %114 = vmatpush1.msra.mxu0 0.0
  %115 = vmatprep.subr.mxu0 0.0
  %116 = vmatpush1.msra.mxu0 0.0
  %117 = vmatprep.subr.mxu0 0.0
  %118 = vmatpush1.msra.mxu0 0.0
  %119 = vmatprep.subr.mxu0 0.0
  %120 = vmatpush1.msra.mxu0 0.0
  %121 = vmatprep.mubr.f32.mxu0 0.0
  %122 = vmatmul.mubr.f32.gmra.mrb[0].mxu0 %v32
  %v123 = vpop.f32.mrb[0].mxu0
  %v124 = vadd.f32 %v55, %v123
  %v125 = vpop.f32.mrb[0].mxu0
  %126 = vmatprep.mubr.f32.mxu0 0.0
  %127 = vmatmul.mubr.f32.gmra.mrb[0].mxu0 %v33
  %v128 = vpop.f32.mrb[0].mxu0
  %v129 = vadd.f32 %v55, %v128
  %v130 = vpop.f32.mrb[0].mxu0
  %131 = vdwg.mxu0
  %132 = vst [vmem:[%s3] sm:$0xff] %v124
  %133 = vst [vmem:[%s3 + $0x8] sm:$0xff] %v129
  // Predicated region
  $region18: #{feed_forward.1} parent=0 // pred_check
    _
  $region19: #{feed_forward.1} parent=0 // pred_check_branch
    %135 = sbr.rel (0) target = $region21
  $region20: #{feed_forward.1} parent=0 // pred_region
    _
  $region21: #{feed_forward.1} parent=0 // pred_fallthru
    _
  // Predicated region
  $region22: #{feed_forward.1} parent=0 // pred_check
    _
  $region23: #{feed_forward.1} parent=0 // pred_check_branch
    %137 = sbr.rel (0) target = $region25
  $region24: #{feed_forward.1} parent=0 // pred_region
    _
  $region25: #{feed_forward.1} parent=0 // pred_fallthru
    _

</llo_original>
